<compile_context>
chip_gen: v6e
topology: v6e:2x2x1
jax: 0.10.0
libtpu: 0.0.40
codegen_flags: <defaults>
</compile_context>

<pallas_src>
import functools

import jax
import jax.numpy as jnp
from jax.experimental import pallas as pl
from jax.experimental.pallas import tpu as pltpu

_LANE = 128
_MAX_LANE_WIDTH = 2048           # cap on the lane-dense last dim
_SMALL_BYTES = 512 * 1024        # below this, skip Pallas and let XLA fuse


# ---------------------------------------------------------------------------
# Device helpers
# ---------------------------------------------------------------------------
def _device_kind():
    try:
        return jax.devices()[0].device_kind.lower()
    except Exception:
        return ""


def _vmem_budget():
    """(target_block_bytes, vmem_limit_bytes) per TPU generation."""
    kind = _device_kind()
    if "v7" in kind:
        # 64 MiB physical VMEM per TC: 4 live buffers x 8 MiB = 32 MiB,
        # 48 MiB scoped limit leaves headroom for internal scratch.
        return 8 * 1024 * 1024, 48 * 1024 * 1024
    # v5e / v6e: 128 MiB physical VMEM but 16 / 32 MiB default scoped limit,
    # so raise it explicitly; 8 MiB blocks -> 32 MiB live buffers.
    return 8 * 1024 * 1024, 64 * 1024 * 1024


def _bf16_compute_ok():
    # v6e / v7x have bf16 VPU + EUP paths; v5e and older do not.
    kind = _device_kind()
    return not any(tag in kind for tag in ("v2", "v3", "v4", "v5"))


def _min_sublanes(dtype):
    # Packed sublane tile: f32 -> (8,128), bf16 -> (16,128), int8/fp8 -> (32,128).
    return {4: 8, 2: 16, 1: 32}.get(jnp.dtype(dtype).itemsize, 8)


# ---------------------------------------------------------------------------
# Kernel
# ---------------------------------------------------------------------------
def _lambda_silu_kernel(x_ref, o_ref, *, compute_dtype):
    # Elementwise hot path of Lambda(func): func(x) = x * sigmoid(x).
    x = x_ref[...].astype(compute_dtype)
    half = jnp.asarray(0.5, compute_dtype)
    # sigmoid(x) == 0.5*tanh(0.5*x) + 0.5  -> a single EUP transcendental
    # per element (no exp + divide), keeping the kernel HBM-bound.
    y = x * (half * jnp.tanh(half * x) + half)
    o_ref[...] = y.astype(o_ref.dtype)


# ---------------------------------------------------------------------------
# Tiling helpers
# ---------------------------------------------------------------------------
def _choose_slab(n_pad):
    """Widest lane-dense last dim (multiple of 128) dividing n_pad, capped."""
    width = _LANE
    for w in range(_MAX_LANE_WIDTH, _LANE - 1, -_LANE):
        if n_pad % w == 0:
            width = w
            break
    return n_pad // width, width


def _choose_block_rows(rows, width, itemsize, sub_min, block_bytes):
    """Largest row tile that fits the per-block VMEM budget, is a multiple of
    the packed sublane tile, and (preferably) divides `rows` exactly with an
    even number of blocks (balanced halves for a 2-TC split)."""
    max_rows = max(sub_min, block_bytes // (width * itemsize))
    if rows <= max_rows:
        return rows                      # single full block
    limit = (max_rows // sub_min) * sub_min
    # First pass: exact divisor producing an even block count.
    for br in range(limit, 0, -sub_min):
        if rows % br == 0 and (rows // br) % 2 == 0:
            return br
    # Second pass: any exact divisor.
    for br in range(limit, 0, -sub_min):
        if rows % br == 0:
            return br
    return limit                         # partial last block (elementwise-safe)


# ---------------------------------------------------------------------------
# Public forward
# ---------------------------------------------------------------------------
def lambda_forward(x, *, force_pallas=False):
    """Applies Lambda(lambda t: t * sigmoid(t)).

    Tiny inputs skip Pallas so XLA can fuse the elementwise op with
    neighboring ops; larger inputs run a lane-dense, row-tiled Pallas kernel.
    """
    orig_shape = x.shape
    dtype = x.dtype
    n = x.size
    itemsize = jnp.dtype(dtype).itemsize

    if n == 0:
        return x

    if not force_pallas and n * itemsize < _SMALL_BYTES:
        # Pure launch overhead at this size: emit the op directly (fusable).
        return x * jax.nn.sigmoid(x)

    # Flatten and pad to a multiple of the lane width (128).
    n_pad = ((n + _LANE - 1) // _LANE) * _LANE
    xf = x.reshape(-1)
    if n_pad != n:
        xf = jnp.pad(xf, (0, n_pad - n))

    sub_min = _min_sublanes(dtype)
    block_bytes, vmem_limit = _vmem_budget()
    rows, width = _choose_slab(n_pad)
    block_rows = _choose_block_rows(rows, width, itemsize, sub_min, block_bytes)
    num_blocks = pl.cdiv(rows, block_rows)

    if dtype == jnp.bfloat16 and _bf16_compute_ok():
        compute_dtype = jnp.bfloat16     # halves vreg pressure on v6e/v7x
    else:
        compute_dtype = jnp.float32      # f32 inputs and v5e bf16 path

    x2d = xf.reshape(rows, width)
    kernel = functools.partial(_lambda_silu_kernel, compute_dtype=compute_dtype)

    # "parallel" lets v7x shard the 1-D grid across its 2 TensorCores;
    # measured no-op on single-TC v5e/v6e.  Single block stays "arbitrary".
    dim_sem = ("arbitrary",) if num_blocks == 1 else ("parallel",)

    out2d = pl.pallas_call(
        kernel,
        out_shape=jax.ShapeDtypeStruct((rows, width), dtype),
        grid_spec=pltpu.PrefetchScalarGridSpec(
            num_scalar_prefetch=0,
            grid=(num_blocks,),
            in_specs=[pl.BlockSpec((block_rows, width), lambda i: (i, 0))],
            out_specs=pl.BlockSpec((block_rows, width), lambda i: (i, 0)),
        ),
        compiler_params=pltpu.CompilerParams(
            dimension_semantics=dim_sem,
            vmem_limit_bytes=vmem_limit,
        ),
        cost_estimate=pl.CostEstimate(
            flops=4 * n_pad,
            transcendentals=n_pad,
            bytes_accessed=2 * n_pad * itemsize,
        ),
    )(x2d)

    out = out2d.reshape(-1)
    if n_pad != n:
        out = out[:n]
    return out.reshape(orig_shape)


def lambda_forward_ref(x):
    """Pure-JAX reference for correctness checking (f32 accumulation)."""
    xf = x.astype(jnp.float32)
    return (xf * jax.nn.sigmoid(xf)).astype(x.dtype)


# ---------------------------------------------------------------------------
# Self-test
# ---------------------------------------------------------------------------
if __name__ == "__main__":
    key = jax.random.PRNGKey(0)
    # NCHW input, consistent with typical conv-net usage of Lambda.
    x = jax.random.normal(key, (2, 4, 16, 16), dtype=jnp.float32)

    # 1) Exercise the actual Pallas kernel (force past the small-input fusion path).
    out_pallas = jax.block_until_ready(lambda_forward(x, force_pallas=True))
    ref = lambda_forward_ref(x)
    assert out_pallas.shape == x.shape and out_pallas.dtype == x.dtype
    # tanh-based sigmoid vs exp-based reference: agree to ~1e-6; keep 1e-4 slack
    # for hardware EUP approximation.
    assert jnp.allclose(out_pallas, ref, atol=1e-4, rtol=1e-4)

    # 2) Default path for this tiny input: fused XLA elementwise (no Pallas).
    out_fast = jax.block_until_ready(lambda_forward(x))
    assert jnp.allclose(out_fast, ref, atol=1e-5, rtol=1e-5)

    print("KERNEL_OK")
</pallas_src>

<mosaic_0001>
module attributes {stable_mosaic.version = 11 : i64} {
  func.func @_lambda_silu_kernel(%arg0: i32, %arg1: memref<1x2048xf32, #tpu.memory_space<vmem>>, %arg2: memref<1x2048xf32, #tpu.memory_space<vmem>>) attributes {dimension_semantics = [#tpu.dimension_semantics<arbitrary>], iteration_bounds = array<i64: 1>, scalar_prefetch = 0 : i64, scratch_operands = 0 : i64, tpu.core_type = #tpu.core_type<tc>, window_params = [{transform_indices = @transform_0, window_bounds = array<i64: 1, 2048>}, {transform_indices = @transform_1, window_bounds = array<i64: 1, 2048>}]} {
    %c0 = arith.constant 0 : index
    %c0_0 = arith.constant 0 : index
    %0 = vector.load %arg1[%c0, %c0_0] : memref<1x2048xf32, #tpu.memory_space<vmem>>, vector<1x2048xf32>
    %cst = arith.constant 5.000000e-01 : f32
    %1 = vector.broadcast %cst : f32 to vector<1x2048xf32>
    %2 = arith.mulf %1, %0 : vector<1x2048xf32>
    %3 = math.tanh %2 : vector<1x2048xf32>
    %cst_1 = arith.constant 5.000000e-01 : f32
    %4 = vector.broadcast %cst_1 : f32 to vector<1x2048xf32>
    %5 = arith.mulf %4, %3 : vector<1x2048xf32>
    %cst_2 = arith.constant 5.000000e-01 : f32
    %6 = vector.broadcast %cst_2 : f32 to vector<1x2048xf32>
    %7 = arith.addf %5, %6 : vector<1x2048xf32>
    %8 = arith.mulf %0, %7 : vector<1x2048xf32>
    %c0_3 = arith.constant 0 : index
    %c0_4 = arith.constant 0 : index
    %9 = vector.load %arg2[%c0_3, %c0_4] : memref<1x2048xf32, #tpu.memory_space<vmem>>, vector<1x2048xf32>
    tpu.vector_store %arg2[%c0_3, %c0_4], %8 {strides = array<i32>} : memref<1x2048xf32, #tpu.memory_space<vmem>>, vector<1x2048xf32>,
    return
  }
  func.func @transform_0(%arg0: i32) -> (i32, i32) {
    %c0_i32 = arith.constant 0 : i32
    %c0_i32_0 = arith.constant 0 : i32
    return %arg0, %c0_i32 : i32, i32
  }
  func.func @transform_1(%arg0: i32) -> (i32, i32) {
    %c0_i32 = arith.constant 0 : i32
    %c0_i32_0 = arith.constant 0 : i32
    return %arg0, %c0_i32 : i32, i32
  }
}

</mosaic_0001>

<llo_original>
// kernel: tpu_custom_call.1
$region0: #{tpu_custom_call.1}
  #allocation0 [shape = 'u32[]', space=smem, size = 0x4, offset = 0x4, fixed_abs, tag = 'smem constant byte address 0x4 - core index']
  #allocation1 [shape = 'u32[144,128]{1,0:T(1,128)}', space=vmem, size = 0x12000, scoped, tag = 'internal scratch']
  %s0 = inlined_call_operand.hbm [shape: f32[1,2048], index: 0, kind: input, shape index: {}]
  %s1 = inlined_call_operand.hbm [shape: f32[1,2048], index: 1, kind: output, shape index: {}]
  %s2 = sld [smem:[#allocation0]]
  $region18: #{tpu_custom_call.1} parent=0
    _
  %s4 = ssub.s32 1, %s2
  %s5 = scalar_select 0, %s4, %s2
  $region1: #{tpu_custom_call.1} parent=0
    #allocation2 [shape = 'u8[8192]{0}', space=vmem, size = 0x2000, scoped, tag = 'input window, operand 0, single buffered']
    #allocation3 [shape = 's32[1]{0}', space=sflag, size = 0x4, scoped, tag = 'scoped memory for tpu_custom_call.1']
    #allocation4 [shape = 's32[1]{0}', space=sflag, size = 0x4, scoped, tag = 'scoped memory for tpu_custom_call.1']
    #allocation5 [shape = 'u8[8192]{0}', space=vmem, size = 0x2000, scoped, tag = 'output window, operand 0, single buffered']
    %6 = vsyncpa [#allocation3], 0
    %7 = vsyncpa [#allocation4], 0
    // Predicated region
    $region2: #{tpu_custom_call.1} parent=1 // pred_check
      _
    $region3: #{tpu_custom_call.1} parent=1 // pred_check_branch
      %9 = sbr.rel (0) target = $region5
    $region4: #{tpu_custom_call.1} parent=1 // pred_region
      %s11 = ssub.s32 256, 256
      %12 = vsyncadd [#allocation3], %s11
      %s14 = sshll.u32 [#allocation2], 4
      %s15 = int_to_ptr.vmem [resolvable:$true] %s14
      %17 = dma.hbm_to_vmem [thread:$0]  %s0, 256, %s15, [#allocation3]
    $region5: #{tpu_custom_call.1} parent=1 // pred_fallthru
      _
    // Predicated region
    $region6: #{tpu_custom_call.1} parent=1 // pred_check
      _
    $region7: #{tpu_custom_call.1} parent=1 // pred_check_branch
      %19 = sbr.rel (0) target = $region9
    $region8: #{tpu_custom_call.1} parent=1 // pred_region
      %20 = dma.done [#allocation3], 256
    $region9: #{tpu_custom_call.1} parent=1 // pred_fallthru
      _
    %v21 = vld [vmem:[#allocation2] sm:$0xff]
    %v22 = vld [vmem:[#allocation2 + $0x8] sm:$0xff]
    %v23 = vmul.f32 %v21, 0.5
    %v24 = vmul.f32 %v22, 0.5
    %v25 = vtanh.pop %v23
    %v26 = vtanh.pop %v24
    %v27 = vmul.f32 %v25, 0.5
    %v28 = vmul.f32 %v26, 0.5
    %v29 = vadd.f32 %v27, 0.5
    %v30 = vadd.f32 %v28, 0.5
    %v31 = vmul.f32 %v21, %v29
    %v32 = vmul.f32 %v22, %v30
    %33 = vst [vmem:[#allocation5] sm:$0xff] %v31
    %34 = vst [vmem:[#allocation5 + $0x8] sm:$0xff] %v32
    // Predicated region
    $region10: #{tpu_custom_call.1} parent=1 // pred_check
      _
    $region11: #{tpu_custom_call.1} parent=1 // pred_check_branch
      %36 = sbr.rel (0) target = $region13
    $region12: #{tpu_custom_call.1} parent=1 // pred_region
      %s38 = ssub.s32 256, 256
      %39 = vsyncadd [#allocation4], %s38
      %s41 = sshll.u32 [#allocation5], 4
      %s42 = int_to_ptr.vmem [resolvable:$true] %s41
      %44 = dma.vmem_to_hbm [thread:$0]  %s42, 256, %s1, [#allocation4]
    $region13: #{tpu_custom_call.1} parent=1 // pred_fallthru
      _
    // Predicated region
    $region14: #{tpu_custom_call.1} parent=1 // pred_check
      _
    $region15: #{tpu_custom_call.1} parent=1 // pred_check_branch
      %46 = sbr.rel (0) target = $region17
    $region16: #{tpu_custom_call.1} parent=1 // pred_region
      %47 = dma.done [#allocation4], 256
    $region17: #{tpu_custom_call.1} parent=1 // pred_fallthru
      _
    %48 = vsyncpa [#allocation3], 1
    %49 = vsyncpa [#allocation4], 1

</llo_original>
